<compile_context>
chip_gen: v6e
topology: v6e:2x2x1
jax: 0.10.0
libtpu: 0.0.40
codegen_flags: <defaults>
</compile_context>

<pallas_src>
import jax
import jax.numpy as jnp
from jax import lax
from jax.experimental import pallas as pl
from jax.experimental.pallas import tpu as pltpu


# Per-step working sets are < a few MiB; 32 MiB scoped VMEM is comfortably
# inside v5e/v6e (128 MiB physical) and under the <=48 MiB guardrail that
# keeps double-buffered blocks inside v7x's 64 MiB per-TensorCore VMEM.
_VMEM_LIMIT = 32 * 1024 * 1024


# ----------------------------------------------------------------------------
# Small helpers
# ----------------------------------------------------------------------------
def _round_up(n, m):
    return ((n + m - 1) // m) * m


def _pad_last(a, target):
    pad = target - a.shape[-1]
    if pad == 0:
        return a
    cfg = [(0, 0)] * (a.ndim - 1) + [(0, pad)]
    return jnp.pad(a, cfg)


def _pick_lane_tile(n, cap=512):
    """Lane-dim tile: largest 128-multiple divisor of n that is <= cap,
    otherwise the full extent (always a legal block shape)."""
    if n <= cap:
        return n
    if n % 128 == 0:
        start = min(cap, n) - (min(cap, n) % 128)
        for t in range(start, 0, -128):
            if n % t == 0:
                return t
    return n


# ----------------------------------------------------------------------------
# Kernel 1: conv-as-matmul, NCHW-ordered output.
#   out[b, :, s_tile] = W(Hd,Kp) @ X[b, :, s_tile] + bias      (bf16 MXU, f32 acc)
# Grid (B, S_tiles), both axes parallel (disjoint output blocks).
# ----------------------------------------------------------------------------
def _conv_kernel(x_ref, w_ref, b_ref, o_ref):
    # x: (1, Kp, ts)  w: (Hd, Kp)  b: (Hd, 1)  o: (1, Hd, ts)
    acc = jnp.dot(w_ref[...], x_ref[0], preferred_element_type=jnp.float32)
    o_ref[0] = (acc + b_ref[...]).astype(o_ref.dtype)


def conv_nchw_matmul(patches, w_mat, b_col, out_dtype=jnp.bfloat16):
    B, Kp, S = patches.shape
    Hd = w_mat.shape[0]
    ts = _pick_lane_tile(S, cap=512)
    return pl.pallas_call(
        _conv_kernel,
        out_shape=jax.ShapeDtypeStruct((B, Hd, S), out_dtype),
        grid=(B, S // ts),
        in_specs=[
            pl.BlockSpec((1, Kp, ts), lambda b, s: (b, 0, s)),
            pl.BlockSpec((Hd, Kp), lambda b, s: (0, 0)),     # resident weight
            pl.BlockSpec((Hd, 1), lambda b, s: (0, 0)),      # resident bias
        ],
        out_specs=pl.BlockSpec((1, Hd, ts), lambda b, s: (b, 0, s)),
        compiler_params=pltpu.CompilerParams(
            dimension_semantics=("parallel", "parallel"),
            vmem_limit_bytes=_VMEM_LIMIT),
    )(patches, w_mat, b_col)


# ----------------------------------------------------------------------------
# Kernel 2: linear projection + (bias+pos) + class-token row, tiled over Mp.
#   out[b, 0,   n_tile] = cls[b] + pos[b]                       ("head")
#   out[b, 1.., n_tile] = x[b] @ W[:, n_tile] + (bias + pos)    ("bias_pos")
# Full-S block per step (T==1): no resident accumulator, the +1 row offset
# causes exactly one unaligned store per grid step.  Grid (B, Mp//tmn).
# ----------------------------------------------------------------------------
def project_with_cls_and_pos(image_patches, w_t, bias_pos, head,
                             out_dtype=jnp.float32):
    B, S, Hd = image_patches.shape
    Mp = w_t.shape[1]
    tmn = _pick_lane_tile(Mp, cap=512)      # Mp is a 128-multiple by construction
    N = Mp // tmn

    def _proj_kernel(x_ref, w_ref, bp_ref, head_ref, o_ref):
        # x: (1,S,Hd)  w: (Hd,tmn)  bp/head: (1,1,tmn)  o: (1,S+1,tmn)
        o_ref[0, 0:1, :] = head_ref[0].astype(o_ref.dtype)
        proj = jnp.dot(x_ref[0], w_ref[...],
                       preferred_element_type=jnp.float32) + bp_ref[0]
        o_ref[0, pl.ds(1, S), :] = proj.astype(o_ref.dtype)

    return pl.pallas_call(
        _proj_kernel,
        out_shape=jax.ShapeDtypeStruct((B, S + 1, Mp), out_dtype),
        grid=(B, N),
        in_specs=[
            pl.BlockSpec((1, S, Hd), lambda b, n: (b, 0, 0)),
            pl.BlockSpec((Hd, tmn), lambda b, n: (0, n)),
            pl.BlockSpec((1, 1, tmn), lambda b, n: (b, 0, n)),
            pl.BlockSpec((1, 1, tmn), lambda b, n: (b, 0, n)),
        ],
        out_specs=pl.BlockSpec((1, S + 1, tmn), lambda b, n: (b, 0, n)),
        compiler_params=pltpu.CompilerParams(
            dimension_semantics=("parallel", "parallel"),
            vmem_limit_bytes=_VMEM_LIMIT),
    )(image_patches, w_t, bias_pos, head)


# ----------------------------------------------------------------------------
# Full forward pass (glue + kernels)
# ----------------------------------------------------------------------------
def input_embedding_forward(x, conv_w, conv_b, lin_w, lin_b, pos_emb, cls_tok,
                            patch_size):
    B, C, H, W = x.shape
    p = patch_size
    hp, wp = H // p, W // p
    S = hp * wp
    Hd = conv_w.shape[0]
    M = lin_w.shape[0]
    K = C * p * p

    # --- glue: cast to bf16 FIRST, then im2col to (B, K, S) column layout ---
    xb = x.astype(jnp.bfloat16)
    patches = xb.reshape(B, C, hp, p, wp, p).transpose(0, 1, 3, 5, 2, 4)
    patches = patches.reshape(B, K, S)                       # K=(c,ph,pw), S=(hy,wx)

    Kp = _round_up(K, 128)                                   # no-op at real ViT (K=768)
    if Kp != K:
        patches = jnp.pad(patches, ((0, 0), (0, Kp - K), (0, 0)))

    wc = conv_w.reshape(Hd, K).astype(jnp.bfloat16)          # (Hd, K)
    if Kp != K:
        wc = jnp.pad(wc, ((0, 0), (0, Kp - K)))
    bc = conv_b.reshape(Hd, 1).astype(jnp.float32)

    # --- Pallas kernel 1: conv-as-matmul, output already NCHW-ordered ---
    conv_out = conv_nchw_matmul(patches, wc, bc)             # (B, Hd, S) bf16

    # --- PyTorch's channel-scramble reshape is now a free contiguous reshape ---
    image_patches = conv_out.reshape(B, S, Hd)               # == torch.reshape(NCHW, [-1,S,Hd])

    # lane-pad only the output-feature dim (weight/bias side — cheap); the Hd
    # contraction dim is NOT padded (it is consumed at full extent, avoiding a
    # copy of the intermediate).
    Mp = _round_up(M, 128)
    wl = lin_w.T.astype(jnp.bfloat16)                        # (Hd, M)
    if Mp != M:
        wl = jnp.pad(wl, ((0, 0), (0, Mp - M)))
    bias_pos = _pad_last((lin_b[None, None, :] + pos_emb[:B]).astype(jnp.float32), Mp)
    head = _pad_last((cls_tok[:B] + pos_emb[:B]).astype(jnp.float32), Mp)

    # --- Pallas kernel 2: projection + bias/pos + class-token row ---
    # out_dtype can be set to bf16 if the downstream block consumes bf16
    # (halves the dominant HBM write stream); f32 matches the module here.
    out = project_with_cls_and_pos(image_patches, wl, bias_pos, head,
                                   out_dtype=jnp.float32)
    if Mp != M:
        out = out[:, :, :M]
    return out


# ----------------------------------------------------------------------------
# Pure-JAX reference for correctness check
# ----------------------------------------------------------------------------
def reference_forward(x, conv_w, conv_b, lin_w, lin_b, pos_emb, cls_tok,
                      patch_size):
    B = x.shape[0]
    hidden = conv_w.shape[0]
    seq_len = (x.shape[2] // patch_size) * (x.shape[3] // patch_size)
    conv = lax.conv_general_dilated(
        x, conv_w, window_strides=(patch_size, patch_size), padding="VALID",
        dimension_numbers=("NCHW", "OIHW", "NCHW"))
    conv = conv + conv_b[None, :, None, None]
    image_patches = conv.reshape(-1, seq_len, hidden)        # PyTorch channel scramble
    proj = jnp.einsum("bsh,mh->bsm", image_patches, lin_w) + lin_b
    out = jnp.concatenate([cls_tok[:B], proj], axis=1)
    out = out + pos_emb[:B]
    return out


if __name__ == "__main__":
    # Small config consistent with the module (conv in_channels is fixed at 3)
    B, C, H, W = 2, 3, 16, 16
    patch_size = 4
    hidden_size = 32          # args.hidden_size (conv out channels / linear in)
    mlp_dim = 64              # args.mlp_dim (linear out / embedding dim)

    key = jax.random.PRNGKey(0)
    k_x, k_cw, k_cb, k_lw, k_lb, k_pos, k_cls = jax.random.split(key, 7)

    x = jax.random.normal(k_x, (B, C, H, W), dtype=jnp.float32)
    conv_w = jax.random.normal(k_cw, (hidden_size, C, patch_size, patch_size),
                               dtype=jnp.float32) * 0.1
    conv_b = jax.random.normal(k_cb, (hidden_size,), dtype=jnp.float32) * 0.1
    lin_w = jax.random.normal(k_lw, (mlp_dim, hidden_size),
                              dtype=jnp.float32) * 0.1
    lin_b = jax.random.normal(k_lb, (mlp_dim,), dtype=jnp.float32) * 0.1
    pos_emb = jax.random.normal(k_pos, (B, 1, mlp_dim), dtype=jnp.float32)
    # TODO(synk): classToken is re-sampled with torch.randn every forward in the
    # PyTorch module; here it is a deterministic input for reproducibility.
    cls_tok = jax.random.normal(k_cls, (B, 1, mlp_dim), dtype=jnp.float32)

    fwd = jax.jit(input_embedding_forward, static_argnums=(7,))
    out = fwd(x, conv_w, conv_b, lin_w, lin_b, pos_emb, cls_tok, patch_size)
    out = jax.block_until_ready(out)

    ref = reference_forward(x, conv_w, conv_b, lin_w, lin_b,
                            pos_emb, cls_tok, patch_size)
    ref = jax.block_until_ready(ref)

    seq_len = (H // patch_size) * (W // patch_size)
    assert out.shape == (B, seq_len + 1, mlp_dim), out.shape
    # bf16 MXU operands + bf16 intermediate (f32 accumulation) => loosened tol.
    assert jnp.allclose(out, ref, atol=5e-2, rtol=5e-2), "mismatch vs reference"
    print("KERNEL_OK")
</pallas_src>

<mosaic_0001>
module attributes {stable_mosaic.version = 11 : i64} {
  func.func @_conv_kernel(%arg0: i32, %arg1: i32, %arg2: memref<1x128x16xbf16, #tpu.memory_space<vmem>>, %arg3: memref<32x128xbf16, #tpu.memory_space<vmem>>, %arg4: memref<32x1xf32, #tpu.memory_space<vmem>>, %arg5: memref<1x32x16xbf16, #tpu.memory_space<vmem>>) attributes {dimension_semantics = [#tpu.dimension_semantics<parallel>, #tpu.dimension_semantics<parallel>], iteration_bounds = array<i64: 2, 1>, scalar_prefetch = 0 : i64, scratch_operands = 0 : i64, tpu.core_type = #tpu.core_type<tc>, window_params = [{transform_indices = @transform_0, window_bounds = array<i64: 1, 128, 16>}, {pipeline_mode = #tpu.pipeline_mode<synchronous>, transform_indices = @transform_1, window_bounds = array<i64: 32, 128>}, {pipeline_mode = #tpu.pipeline_mode<synchronous>, transform_indices = @transform_2, window_bounds = array<i64: 32, 1>}, {transform_indices = @transform_3, window_bounds = array<i64: 1, 32, 16>}]} {
    %c0 = arith.constant 0 : index
    %c0_0 = arith.constant 0 : index
    %0 = vector.load %arg3[%c0, %c0_0] : memref<32x128xbf16, #tpu.memory_space<vmem>>, vector<32x128xbf16>
    %c0_1 = arith.constant 0 : index
    %c0_2 = arith.constant 0 : index
    %c0_3 = arith.constant 0 : index
    %1 = vector.load %arg2[%c0_1, %c0_2, %c0_3] : memref<1x128x16xbf16, #tpu.memory_space<vmem>>, vector<1x128x16xbf16>
    %2 = vector.shape_cast %1 : vector<1x128x16xbf16> to vector<128x16xbf16>
    %cst = arith.constant dense<0.000000e+00> : vector<32x16xf32>
    %3 = tpu.matmul %0, %2, %cst {dimension_numbers = #tpu.dot_dimension_numbers<[1], [0], [0], [1], [0, 0, 1, 1], [], []>} : vector<32x128xbf16>, vector<128x16xbf16>, vector<32x16xf32> -> vector<32x16xf32>
    %c0_4 = arith.constant 0 : index
    %c0_5 = arith.constant 0 : index
    %4 = vector.load %arg4[%c0_4, %c0_5] : memref<32x1xf32, #tpu.memory_space<vmem>>, vector<32x1xf32>
    %5 = vector.broadcast %4 : vector<32x1xf32> to vector<32x16xf32>
    %6 = arith.addf %3, %5 : vector<32x16xf32>
    %7 = arith.truncf %6 : vector<32x16xf32> to vector<32x16xbf16>
    %c0_6 = arith.constant 0 : index
    %c0_7 = arith.constant 0 : index
    %c0_8 = arith.constant 0 : index
    %8 = vector.load %arg5[%c0_6, %c0_7, %c0_8] : memref<1x32x16xbf16, #tpu.memory_space<vmem>>, vector<1x32x16xbf16>
    %9 = vector.shape_cast %8 : vector<1x32x16xbf16> to vector<32x16xbf16>
    %10 = vector.shape_cast %7 : vector<32x16xbf16> to vector<1x32x16xbf16>
    tpu.vector_store %arg5[%c0_6, %c0_7, %c0_8], %10 {strides = array<i32>} : memref<1x32x16xbf16, #tpu.memory_space<vmem>>, vector<1x32x16xbf16>,
    return
  }
  func.func @transform_0(%arg0: i32, %arg1: i32) -> (i32, i32, i32) {
    %c0_i32 = arith.constant 0 : i32
    %c0_i32_0 = arith.constant 0 : i32
    return %arg0, %c0_i32, %arg1 : i32, i32, i32
  }
  func.func @transform_1(%arg0: i32, %arg1: i32) -> (i32, i32) {
    %c0_i32 = arith.constant 0 : i32
    %c0_i32_0 = arith.constant 0 : i32
    %c0_i32_1 = arith.constant 0 : i32
    return %c0_i32, %c0_i32_0 : i32, i32
  }
  func.func @transform_2(%arg0: i32, %arg1: i32) -> (i32, i32) {
    %c0_i32 = arith.constant 0 : i32
    %c0_i32_0 = arith.constant 0 : i32
    %c0_i32_1 = arith.constant 0 : i32
    return %c0_i32, %c0_i32_0 : i32, i32
  }
  func.func @transform_3(%arg0: i32, %arg1: i32) -> (i32, i32, i32) {
    %c0_i32 = arith.constant 0 : i32
    %c0_i32_0 = arith.constant 0 : i32
    return %arg0, %c0_i32, %arg1 : i32, i32, i32
  }
}

module attributes {stable_mosaic.version = 11 : i64} {
  func.func @_proj_kernel(%arg0: i32, %arg1: i32, %arg2: memref<1x16x32xbf16, #tpu.memory_space<vmem>>, %arg3: memref<32x128xbf16, #tpu.memory_space<vmem>>, %arg4: memref<1x1x128xf32, #tpu.memory_space<vmem>>, %arg5: memref<1x1x128xf32, #tpu.memory_space<vmem>>, %arg6: memref<1x17x128xf32, #tpu.memory_space<vmem>>) attributes {dimension_semantics = [#tpu.dimension_semantics<parallel>, #tpu.dimension_semantics<parallel>], iteration_bounds = array<i64: 2, 1>, scalar_prefetch = 0 : i64, scratch_operands = 0 : i64, tpu.core_type = #tpu.core_type<tc>, window_params = [{transform_indices = @transform_0, window_bounds = array<i64: 1, 16, 32>}, {transform_indices = @transform_1, window_bounds = array<i64: 32, 128>}, {transform_indices = @transform_2, window_bounds = array<i64: 1, 1, 128>}, {transform_indices = @transform_3, window_bounds = array<i64: 1, 1, 128>}, {transform_indices = @transform_4, window_bounds = array<i64: 1, 17, 128>}]} {
    %c0 = arith.constant 0 : index
    %c0_0 = arith.constant 0 : index
    %c0_1 = arith.constant 0 : index
    %0 = vector.load %arg5[%c0, %c0_0, %c0_1] : memref<1x1x128xf32, #tpu.memory_space<vmem>>, vector<1x1x128xf32>
    %1 = vector.shape_cast %0 : vector<1x1x128xf32> to vector<1x128xf32>
    %c0_2 = arith.constant 0 : index
    %c0_3 = arith.constant 0 : index
    %c0_4 = arith.constant 0 : index
    %2 = vector.load %arg6[%c0_2, %c0_3, %c0_4] : memref<1x17x128xf32, #tpu.memory_space<vmem>>, vector<1x1x128xf32>
    %3 = vector.shape_cast %2 : vector<1x1x128xf32> to vector<1x128xf32>
    %4 = vector.shape_cast %1 : vector<1x128xf32> to vector<1x1x128xf32>
    tpu.vector_store %arg6[%c0_2, %c0_3, %c0_4], %4 {strides = array<i32>} : memref<1x17x128xf32, #tpu.memory_space<vmem>>, vector<1x1x128xf32>,
    %c0_5 = arith.constant 0 : index
    %c0_6 = arith.constant 0 : index
    %c0_7 = arith.constant 0 : index
    %5 = vector.load %arg2[%c0_5, %c0_6, %c0_7] : memref<1x16x32xbf16, #tpu.memory_space<vmem>>, vector<1x16x32xbf16>
    %6 = vector.shape_cast %5 : vector<1x16x32xbf16> to vector<16x32xbf16>
    %c0_8 = arith.constant 0 : index
    %c0_9 = arith.constant 0 : index
    %7 = vector.load %arg3[%c0_8, %c0_9] : memref<32x128xbf16, #tpu.memory_space<vmem>>, vector<32x128xbf16>
    %cst = arith.constant dense<0.000000e+00> : vector<16x128xf32>
    %8 = tpu.matmul %6, %7, %cst {dimension_numbers = #tpu.dot_dimension_numbers<[1], [0], [0], [1], [0, 0, 1, 1], [], []>} : vector<16x32xbf16>, vector<32x128xbf16>, vector<16x128xf32> -> vector<16x128xf32>
    %c0_10 = arith.constant 0 : index
    %c0_11 = arith.constant 0 : index
    %c0_12 = arith.constant 0 : index
    %9 = vector.load %arg4[%c0_10, %c0_11, %c0_12] : memref<1x1x128xf32, #tpu.memory_space<vmem>>, vector<1x1x128xf32>
    %10 = vector.shape_cast %9 : vector<1x1x128xf32> to vector<1x128xf32>
    %11 = vector.broadcast %10 : vector<1x128xf32> to vector<16x128xf32>
    %12 = arith.addf %8, %11 : vector<16x128xf32>
    %c0_13 = arith.constant 0 : index
    %c1 = arith.constant 1 : index
    %c0_14 = arith.constant 0 : index
    %13 = vector.load %arg6[%c0_13, %c1, %c0_14] : memref<1x17x128xf32, #tpu.memory_space<vmem>>, vector<1x16x128xf32>
    %14 = vector.shape_cast %13 : vector<1x16x128xf32> to vector<16x128xf32>
    %15 = vector.shape_cast %12 : vector<16x128xf32> to vector<1x16x128xf32>
    tpu.vector_store %arg6[%c0_13, %c1, %c0_14], %15 {strides = array<i32>} : memref<1x17x128xf32, #tpu.memory_space<vmem>>, vector<1x16x128xf32>,
    return
  }
  func.func @transform_0(%arg0: i32, %arg1: i32) -> (i32, i32, i32) {
    %c0_i32 = arith.constant 0 : i32
    %c0_i32_0 = arith.constant 0 : i32
    %c0_i32_1 = arith.constant 0 : i32
    return %arg0, %c0_i32, %c0_i32_0 : i32, i32, i32
  }
  func.func @transform_1(%arg0: i32, %arg1: i32) -> (i32, i32) {
    %c0_i32 = arith.constant 0 : i32
    %c0_i32_0 = arith.constant 0 : i32
    return %c0_i32, %arg1 : i32, i32
  }
  func.func @transform_2(%arg0: i32, %arg1: i32) -> (i32, i32, i32) {
    %c0_i32 = arith.constant 0 : i32
    %c0_i32_0 = arith.constant 0 : i32
    return %arg0, %c0_i32, %arg1 : i32, i32, i32
  }
  func.func @transform_3(%arg0: i32, %arg1: i32) -> (i32, i32, i32) {
    %c0_i32 = arith.constant 0 : i32
    %c0_i32_0 = arith.constant 0 : i32
    return %arg0, %c0_i32, %arg1 : i32, i32, i32
  }
  func.func @transform_4(%arg0: i32, %arg1: i32) -> (i32, i32, i32) {
    %c0_i32 = arith.constant 0 : i32
    %c0_i32_0 = arith.constant 0 : i32
    return %arg0, %c0_i32, %arg1 : i32, i32, i32
  }
}

</mosaic_0001>

<llo_original>
// kernel: input_embedding_forward.3
$region0: #{input_embedding_forward.3}
  #allocation0 [shape = 'u32[]', space=smem, size = 0x4, offset = 0x4, fixed_abs, tag = 'smem constant byte address 0x4 - core index']
  #allocation1 [shape = 'u32[144,128]{1,0:T(1,128)}', space=vmem, size = 0x12000, scoped, tag = 'internal scratch']
  %s0 = inlined_call_operand.vmem [shape: bf16[2,16,32], index: 0, kind: input, shape index: {}]
  %s1 = inlined_call_operand.vmem [shape: bf16[32,128], index: 1, kind: input, shape index: {}]
  %s2 = inlined_call_operand.vmem [shape: f32[2,1,128], index: 2, kind: input, shape index: {}]
  %s3 = inlined_call_operand.vmem [shape: f32[2,1,128], index: 3, kind: input, shape index: {}]
  %s4 = inlined_call_operand.vmem [shape: f32[2,17,128], index: 4, kind: output, shape index: {}]
  %s5 = sld [smem:[#allocation0]]
  $region49: #{input_embedding_forward.3} parent=0
    _
  %s7 = ssub.s32 1, %s5
  %s8 = scalar_select 0, %s7, %s5
  loop: start=0, step=1, limit=4
  $region2: #{input_embedding_forward.3} parent=0 // loop_pre_header
    _
  $region3: #{input_embedding_forward.3} parent=0 // loop_header
    %s10 = sphi 0, %s14
    %p11 = scmp.ge.s32.totalorder %s10, 4
    %s17 = sphi 0, %s29
    %s18 = sphi 0, %s25
    %s19 = sphi 0, %s17
    %s20 = sphi 0, %s18
    %s21 = sphi 0, %s19
    %s22 = sphi 0, %s20
    %s32 = sphi 0, %s34
    %s35 = sphi 0, %s32
    %s36 = sphi 0, %s35
    %s52 = sphi 0, %s36
    %s58 = sphi 0, %s60
    %s61 = sphi 0, %s58
    %s62 = sphi 0, %s61
    %s78 = sphi 0, %s62
    %s86 = sphi 0, %s88
    %s89 = sphi 0, %s86
    %s90 = sphi 0, %s89
    %s106 = sphi 0, %s90
    %s114 = sphi 0, %s116
    %s117 = sphi 0, %s114
    %s118 = sphi 0, %s117
    %s134 = sphi 0, %s118
    %s142 = sphi 0, %s144
    %s145 = sphi 0, %s142
    %s146 = sphi 0, %s145
    %s162 = sphi 0, %s146
  $region4: #{input_embedding_forward.3} parent=0 // loop_header_branch
    %13 = sbr.rel (%p11) target = $region8
  $region5: #{input_embedding_forward.3} parent=0 // loop_body
    %s15 = ssub.s32 %s10, 1
    %s16 = ssub.s32 %s10, 2
    %s23 = sadd.s32 1, %s18
    %p24 = scmp.ge.s32.totalorder %s23, 1
    %s25 = scalar_select %p24, 0, %s23
    %s26 = sadd.s32 1, %s17
    %s27 = scalar_select %p24, %s26, %s17
    %p28 = scmp.ge.s32.totalorder %s27, 2
    %s29 = scalar_select %p28, 0, %s27
    %s30 = ssub.s32 %s17, %s29
    %p31 = scmp.eq.s32.totalorder %s30, 0
    %s33 = sadd.s32 %s32, 1
    %s34 = scalar_select %p31, %s32, %s33
    %p37 = pneg %p31
    %p38 = scmp.eq.s32.totalorder %s10, 1
    %p39 = por %p37, %p38
    %p40 = scmp.ne.s32.totalorder %s32, %s35
    %p41 = scmp.eq.s32.totalorder %s10, 0
    %p42 = por %p40, %p41
    %p43 = scmp.ne.s32.totalorder %s32, %s35
    %p44 = scmp.eq.s32.totalorder %s15, 1
    %p45 = por %p43, %p44
    %p46 = scmp.ne.s32.totalorder %s35, %s36
    %p47 = scmp.eq.s32.totalorder %s15, 0
    %p48 = por %p46, %p47
    %p49 = scmp.ne.s32.totalorder %s35, %s36
    %p50 = scmp.eq.s32.totalorder %s16, 1
    %p51 = por %p49, %p50
    %p53 = scmp.ne.s32.totalorder %s36, %s52
    %p54 = scmp.eq.s32.totalorder %s16, 0
    %p55 = por %p53, %p54
    %s56 = ssub.s32 %s18, %s25
    %p57 = scmp.eq.s32.totalorder %s56, 0
    %s59 = sadd.s32 %s58, 1
    %s60 = scalar_select %p57, %s58, %s59
    %p63 = pneg %p57
    %p64 = scmp.eq.s32.totalorder %s10, 1
    %p65 = por %p63, %p64
    %p66 = scmp.ne.s32.totalorder %s58, %s61
    %p67 = scmp.eq.s32.totalorder %s10, 0
    %p68 = por %p66, %p67
    %p69 = scmp.ne.s32.totalorder %s58, %s61
    %p70 = scmp.eq.s32.totalorder %s15, 1
    %p71 = por %p69, %p70
    %p72 = scmp.ne.s32.totalorder %s61, %s62
    %p73 = scmp.eq.s32.totalorder %s15, 0
    %p74 = por %p72, %p73
    %p75 = scmp.ne.s32.totalorder %s61, %s62
    %p76 = scmp.eq.s32.totalorder %s16, 1
    %p77 = por %p75, %p76
    %p79 = scmp.ne.s32.totalorder %s62, %s78
    %p80 = scmp.eq.s32.totalorder %s16, 0
    %p81 = por %p79, %p80
    %s82 = ssub.s32 %s17, %s29
    %s83 = ssub.s32 %s18, %s25
    %s84 = sor.u32 %s82, %s83
    %p85 = scmp.eq.s32.totalorder %s84, 0
    %s87 = sadd.s32 %s86, 1
    %s88 = scalar_select %p85, %s86, %s87
    %p91 = pneg %p85
    %p92 = scmp.eq.s32.totalorder %s10, 1
    %p93 = por %p91, %p92
    %p94 = scmp.ne.s32.totalorder %s86, %s89
    %p95 = scmp.eq.s32.totalorder %s10, 0
    %p96 = por %p94, %p95
    %p97 = scmp.ne.s32.totalorder %s86, %s89
    %p98 = scmp.eq.s32.totalorder %s15, 1
    %p99 = por %p97, %p98
    %p100 = scmp.ne.s32.totalorder %s89, %s90
    %p101 = scmp.eq.s32.totalorder %s15, 0
    %p102 = por %p100, %p101
    %p103 = scmp.ne.s32.totalorder %s89, %s90
    %p104 = scmp.eq.s32.totalorder %s16, 1
    %p105 = por %p103, %p104
    %p107 = scmp.ne.s32.totalorder %s90, %s106
    %p108 = scmp.eq.s32.totalorder %s16, 0
    %p109 = por %p107, %p108
    %s110 = ssub.s32 %s17, %s29
    %s111 = ssub.s32 %s18, %s25
    %s112 = sor.u32 %s110, %s111
    %p113 = scmp.eq.s32.totalorder %s112, 0
    %s115 = sadd.s32 %s114, 1
    %s116 = scalar_select %p113, %s114, %s115
    %p119 = pneg %p113
    %p120 = scmp.eq.s32.totalorder %s10, 1
    %p121 = por %p119, %p120
    %p122 = scmp.ne.s32.totalorder %s114, %s117
    %p123 = scmp.eq.s32.totalorder %s10, 0
    %p124 = por %p122, %p123
    %p125 = scmp.ne.s32.totalorder %s114, %s117
    %p126 = scmp.eq.s32.totalorder %s15, 1
    %p127 = por %p125, %p126
    %p128 = scmp.ne.s32.totalorder %s117, %s118
    %p129 = scmp.eq.s32.totalorder %s15, 0
    %p130 = por %p128, %p129
    %p131 = scmp.ne.s32.totalorder %s117, %s118
    %p132 = scmp.eq.s32.totalorder %s16, 1
    %p133 = por %p131, %p132
    %p135 = scmp.ne.s32.totalorder %s118, %s134
    %p136 = scmp.eq.s32.totalorder %s16, 0
    %p137 = por %p135, %p136
    %s138 = ssub.s32 %s17, %s29
    %s139 = ssub.s32 %s18, %s25
    %s140 = sor.u32 %s138, %s139
    %p141 = scmp.eq.s32.totalorder %s140, 0
    %s143 = sadd.s32 %s142, 1
    %s144 = scalar_select %p141, %s142, %s143
    %p147 = pneg %p141
    %p148 = scmp.eq.s32.totalorder %s10, 1
    %p149 = por %p147, %p148
    %p150 = scmp.ne.s32.totalorder %s142, %s145
    %p151 = scmp.eq.s32.totalorder %s10, 0
    %p152 = por %p150, %p151
    %p153 = scmp.ne.s32.totalorder %s142, %s145
    %p154 = scmp.eq.s32.totalorder %s15, 1
    %p155 = por %p153, %p154
    %p156 = scmp.ne.s32.totalorder %s145, %s146
    %p157 = scmp.eq.s32.totalorder %s15, 0
    %p158 = por %p156, %p157
    %p159 = scmp.ne.s32.totalorder %s145, %s146
    %p160 = scmp.eq.s32.totalorder %s16, 1
    %p161 = por %p159, %p160
    %p163 = scmp.ne.s32.totalorder %s146, %s162
    %p164 = scmp.eq.s32.totalorder %s16, 0
    %p165 = por %p163, %p164
    %p166 = scmp.le.s32.totalorder 1, %s10
    %p167 = scmp.lt.s32.totalorder %s10, 3
    %p168 = pnand %p166, %p167
    %p169 = pneg %p168
    // Predicated region
    $region9: #{input_embedding_forward.3} parent=5 // pred_check
      _
    $region10: #{input_embedding_forward.3} parent=5 // pred_check_branch
      %171 = sbr.rel (%p168) target = $region12
    $region11: #{input_embedding_forward.3} parent=5 // pred_region
      %s172 = ssub.s32 %s10, 1
      // Predicated region
      $region13: #{input_embedding_forward.3} parent=11 // pred_check
        %p173 = pneg %p74
      $region14: #{input_embedding_forward.3} parent=11 // pred_check_branch
        %175 = sbr.rel (%p173) target = $region16
      $region15: #{input_embedding_forward.3} parent=11 // pred_region
        %p176 = scmp.lt.s32.totalorder %s20, 0
        %s177 = scalar_select %p176, %s20, 0
        %s178 = smul.addr %s177, 4
        %s179 = scalar_lea.vmem %s1, %s178
      $region16: #{input_embedding_forward.3} parent=11 // pred_fallthru
        _
    $region12: #{input_embedding_forward.3} parent=5 // pred_fallthru
      _
    %p180 = scmp.lt.s32.totalorder %s10, 2
    // Predicated region
    $region17: #{input_embedding_forward.3} parent=5 // pred_check
      %p181 = pneg %p180
    $region18: #{input_embedding_forward.3} parent=5 // pred_check_branch
      %183 = sbr.rel (%p181) target = $region20
    $region19: #{input_embedding_forward.3} parent=5 // pred_region
      // Predicated region
      $region21: #{input_embedding_forward.3} parent=19 // pred_check
        %p184 = pneg %p42
      $region22: #{input_embedding_forward.3} parent=19 // pred_check_branch
        %186 = sbr.rel (%p184) target = $region24
      $region23: #{input_embedding_forward.3} parent=19 // pred_region
        %p187 = scmp.lt.s32.totalorder %s17, 1
        %s188 = scalar_select %p187, %s17, 1
        %s189 = smul.addr %s188, 2
        %s190 = smul.addr %s189, 4
        %s191 = scalar_lea.vmem %s0, %s190
      $region24: #{input_embedding_forward.3} parent=19 // pred_fallthru
        _
      // Predicated region
      $region25: #{input_embedding_forward.3} parent=19 // pred_check
        %p192 = pneg %p96
      $region26: #{input_embedding_forward.3} parent=19 // pred_check_branch
        %194 = sbr.rel (%p192) target = $region28
      $region27: #{input_embedding_forward.3} parent=19 // pred_region
        %p195 = scmp.lt.s32.totalorder %s17, 1
        %s196 = scalar_select %p195, %s17, 1
        %p197 = scmp.lt.s32.totalorder %s18, 0
        %s198 = scalar_select %p197, %s18, 0
        %s199 = sadd.s32 %s198, %s196
        %s200 = scalar_lea.vmem %s2, %s199
      $region28: #{input_embedding_forward.3} parent=19 // pred_fallthru
        _
      // Predicated region
      $region29: #{input_embedding_forward.3} parent=19 // pred_check
        %p201 = pneg %p124
      $region30: #{input_embedding_forward.3} parent=19 // pred_check_branch
        %203 = sbr.rel (%p201) target = $region32
      $region31: #{input_embedding_forward.3} parent=19 // pred_region
        %p204 = scmp.lt.s32.totalorder %s17, 1
        %s205 = scalar_select %p204, %s17, 1
        %p206 = scmp.lt.s32.totalorder %s18, 0
        %s207 = scalar_select %p206, %s18, 0
        %s208 = sadd.s32 %s207, %s205
        %s209 = scalar_lea.vmem %s3, %s208
      $region32: #{input_embedding_forward.3} parent=19 // pred_fallthru
        _
    $region20: #{input_embedding_forward.3} parent=5 // pred_fallthru
      _
    %p210 = scmp.le.s32.totalorder 1, %s10
    %p211 = scmp.lt.s32.totalorder %s10, 3
    %p212 = pnand %p210, %p211
    %p213 = pneg %p212
    // Predicated region
    $region33: #{input_embedding_forward.3} parent=5 // pred_check
      _
    $region34: #{input_embedding_forward.3} parent=5 // pred_check_branch
      %215 = sbr.rel (%p212) target = $region36
    $region35: #{input_embedding_forward.3} parent=5 // pred_region
      %s216 = ssub.s32 %s10, 1
      %p217 = scmp.lt.s32.totalorder %s19, 1
      %s218 = scalar_select %p217, %s19, 1
      %s219 = smul.addr %s218, 2
      %s220 = smul.addr %s219, 4
      %s221 = scalar_lea.vmem %s0, %s220
      %p222 = pneg %p48
      %p223 = pneg %p45
      %p224 = scmp.lt.s32.totalorder %s20, 0
      %s225 = scalar_select %p224, %s20, 0
      %s226 = smul.addr %s225, 4
      %s227 = scalar_lea.vmem %s1, %s226
      %p228 = pneg %p74
      %p229 = pneg %p71
      %p230 = scmp.lt.s32.totalorder %s19, 1
      %s231 = scalar_select %p230, %s19, 1
      %p232 = scmp.lt.s32.totalorder %s20, 0
      %s233 = scalar_select %p232, %s20, 0
      %s234 = sadd.s32 %s233, %s231
      %s235 = scalar_lea.vmem %s2, %s234
      %p236 = pneg %p102
      %p237 = pneg %p99
      %p238 = scmp.lt.s32.totalorder %s19, 1
      %s239 = scalar_select %p238, %s19, 1
      %p240 = scmp.lt.s32.totalorder %s20, 0
      %s241 = scalar_select %p240, %s20, 0
      %s242 = sadd.s32 %s241, %s239
      %s243 = scalar_lea.vmem %s3, %s242
      %p244 = pneg %p130
      %p245 = pneg %p127
      %p246 = pneg %p158
      %p247 = pneg %p155
      %p248 = scmp.lt.s32.totalorder %s19, 1
      %s249 = scalar_select %p248, %s19, 1
      %p250 = scmp.lt.s32.totalorder %s20, 0
      %s251 = scalar_select %p250, %s20, 0
      %s252 = smul.addr %s249, 3
      %s253 = sadd.s32 %s251, %s252
      %s254 = smul.addr %s253, 8
      %s255 = scalar_lea.vmem %s4, %s254
      %p256 = scmp.lt.s32.totalorder %s19, 1
      %s257 = scalar_select %p256, %s19, 1
      %s258 = smul.addr %s257, 2
      %s259 = smul.addr %s258, 4
      %s260 = scalar_lea.vmem %s0, %s259
      %p261 = scmp.lt.s32.totalorder %s20, 0
      %s262 = scalar_select %p261, %s20, 0
      %s263 = smul.addr %s262, 4
      %s264 = scalar_lea.vmem %s1, %s263
      %p265 = scmp.lt.s32.totalorder %s19, 1
      %s266 = scalar_select %p265, %s19, 1
      %p267 = scmp.lt.s32.totalorder %s20, 0
      %s268 = scalar_select %p267, %s20, 0
      %s269 = sadd.s32 %s268, %s266
      %s270 = scalar_lea.vmem %s2, %s269
      %p271 = scmp.lt.s32.totalorder %s19, 1
      %s272 = scalar_select %p271, %s19, 1
      %p273 = scmp.lt.s32.totalorder %s20, 0
      %s274 = scalar_select %p273, %s20, 0
      %s275 = sadd.s32 %s274, %s272
      %s276 = scalar_lea.vmem %s3, %s275
      %p277 = scmp.lt.s32.totalorder %s19, 1
      %s278 = scalar_select %p277, %s19, 1
      %p279 = scmp.lt.s32.totalorder %s20, 0
      %s280 = scalar_select %p279, %s20, 0
      %s281 = smul.addr %s278, 3
      %s282 = sadd.s32 %s280, %s281
      %s283 = smul.addr %s282, 8
      %s284 = scalar_lea.vmem %s4, %s283
      %v286 = vld [vmem:[%s276] sm:$0x1]
      %287 = vst [vmem:[%s284] sm:$0x1] %v286
      %v288 = vld [vmem:[%s260] sm:$0xf]
      %v289 = vld [vmem:[%s260 + $0x4] sm:$0xf]
      %v290 = vld [vmem:[%s264] sm:$0xf]
      %v291 = vld [vmem:[%s264 + $0x4] sm:$0xf]
      %v292 = vld [vmem:[%s264 + $0x8] sm:$0xf]
      %v293 = vld [vmem:[%s264 + $0xc] sm:$0xf]
      %v294 = vld [vmem:[%s270] sm:$0x1]
      %v296 = vlaneseq
      %v297 = vshrl.u32 %v296, 7
      %v298 = vsub.s32 0, %v297
      %v299 = vrot.slane %v294, %v298
      %v303 = vunpack.c.l.b16 %v288
      %v304 = vunpack.c.l.b16 %v289
      %v305 = vpack.c.b16 %v304, %v303
      %v310 = vunpack.c.l.b16 %v290
      %v311 = vunpack.c.l.b16 %v291
      %v312 = vunpack.c.l.b16 %v292
      %v313 = vunpack.c.l.b16 %v293
      %v314 = vpack.c.b16 %v311, %v310
      %v315 = vpack.c.b16 %v313, %v312
      %vm318 = vcmask 261120
      %v320 = vsel %vm318, %v305, 0
      %322 = vmatprep.subr.bf16.mxu0 0
      %323 = vmatpush1.bf16.msra.mxu0 0
      %324 = vmatprep.subr.bf16.mxu0 0
      %325 = vmatpush1.bf16.msra.mxu0 0
      %326 = vmatprep.subr.bf16.mxu0 0
      %327 = vmatpush1.bf16.msra.mxu0 0
      %328 = vmatprep.subr.bf16.mxu0 0
      %329 = vmatpush1.bf16.msra.mxu0 0
      %330 = vmatprep.subr.bf16.mxu0 0
      %331 = vmatpush1.bf16.msra.mxu0 0
      %332 = vmatprep.subr.bf16.mxu0 0
      %333 = vmatpush1.bf16.msra.mxu0 0
      %334 = vmatprep.subr.bf16.mxu0 0
      %335 = vmatpush1.bf16.msra.mxu0 %v315
      %336 = vmatprep.subr.bf16.mxu0 0
      %337 = vmatpush1.bf16.msra.mxu0 %v314
      %338 = vmatprep.subr.bf16.mxu0 0
      %339 = vmatpush2.bf16.msra.mxu0 0
      %340 = vmatprep.subr.bf16.mxu0 0
      %341 = vmatpush2.bf16.msra.mxu0 0
      %342 = vmatprep.subr.bf16.mxu0 0
      %343 = vmatpush2.bf16.msra.mxu0 0
      %344 = vmatprep.subr.bf16.mxu0 0
      %345 = vmatpush2.bf16.msra.mxu0 0
      %346 = vmatprep.subr.bf16.mxu0 0
      %347 = vmatpush2.bf16.msra.mxu0 0
      %348 = vmatprep.subr.bf16.mxu0 0
      %349 = vmatpush2.bf16.msra.mxu0 0
      %350 = vmatprep.subr.bf16.mxu0 0
      %351 = vmatpush2.bf16.msra.mxu0 0
      %352 = vmatprep.subr.bf16.mxu0 0
      %353 = vmatpush2.bf16.msra.mxu0 0
      %354 = vmatprep.mubr.bf16.mxu0 0
      %355 = vmatmul.mubr.bf16.gmra.mxu0 %v320
      %v356 = vpop.f32.mrf.mxu0
      %v357 = vadd.f32 %v299, %v356
      %v358 = vpop.f32.mrf.mxu0
      %v359 = vpop.f32.mrf.mxu0
      %v360 = vadd.f32 %v299, %v359
      %v361 = vpop.f32.mrf.mxu0
      %362 = vdwg.mxu0
      %363 = vst [vmem:[%s284 + $0x1] sm:$0xff] %v357
      %364 = vst [vmem:[%s284 + $0x9] sm:$0xff] %v360
      %p365 = scmp.lt.s32.totalorder %s19, 1
      %s366 = scalar_select %p365, %s19, 1
      %p367 = scmp.lt.s32.totalorder %s20, 0
      %s368 = scalar_select %p367, %s20, 0
      %s369 = smul.addr %s366, 3
      %s370 = sadd.s32 %s368, %s369
      %s371 = smul.addr %s370, 8
      %s372 = scalar_lea.vmem %s4, %s371
      // Predicated region
      $region37: #{input_embedding_forward.3} parent=35 // pred_check
        %p373 = pneg %p155
      $region38: #{input_embedding_forward.3} parent=35 // pred_check_branch
        %375 = sbr.rel (%p373) target = $region40
      $region39: #{input_embedding_forward.3} parent=35 // pred_region
        _
      $region40: #{input_embedding_forward.3} parent=35 // pred_fallthru
        _
    $region36: #{input_embedding_forward.3} parent=5 // pred_fallthru
      _
    %p376 = scmp.le.s32.totalorder 2, %s10
    // Predicated region
    $region41: #{input_embedding_forward.3} parent=5 // pred_check
      %p377 = pneg %p376
    $region42: #{input_embedding_forward.3} parent=5 // pred_check_branch
      %379 = sbr.rel (%p377) target = $region44
    $region43: #{input_embedding_forward.3} parent=5 // pred_region
      %s380 = ssub.s32 %s10, 2
      // Predicated region
      $region45: #{input_embedding_forward.3} parent=43 // pred_check
        %p381 = pneg %p161
      $region46: #{input_embedding_forward.3} parent=43 // pred_check_branch
        %383 = sbr.rel (%p381) target = $region48
      $region47: #{input_embedding_forward.3} parent=43 // pred_region
        %p384 = scmp.lt.s32.totalorder %s21, 1
        %s385 = scalar_select %p384, %s21, 1
        %p386 = scmp.lt.s32.totalorder %s22, 0
        %s387 = scalar_select %p386, %s22, 0
        %s388 = smul.addr %s385, 3
        %s389 = sadd.s32 %s387, %s388
        %s390 = smul.addr %s389, 8
        %s391 = scalar_lea.vmem %s4, %s390
      $region48: #{input_embedding_forward.3} parent=43 // pred_fallthru
        _
    $region44: #{input_embedding_forward.3} parent=5 // pred_fallthru
      _
  $region6: #{input_embedding_forward.3} parent=0 // loop_footer
    %s14 = sadd.s32 1, %s10
  $region7: #{input_embedding_forward.3} parent=0 // loop_footer_branch
    %9 = sbr.rel target = $region3
  $region8: #{input_embedding_forward.3} parent=0 // loop_exit
    _

// kernel: input_embedding_forward.2
$region0: #{input_embedding_forward.2}
  #allocation0 [shape = 'u32[]', space=smem, size = 0x4, offset = 0x4, fixed_abs, tag = 'smem constant byte address 0x4 - core index']
  #allocation1 [shape = 'u32[144,128]{1,0:T(1,128)}', space=vmem, size = 0x12000, scoped, tag = 'internal scratch']
  %s0 = inlined_call_operand.vmem [shape: bf16[2,128,16], index: 0, kind: input, shape index: {}]
  %s1 = inlined_call_operand.vmem [shape: bf16[32,128], index: 1, kind: input, shape index: {}]
  %s2 = inlined_call_operand.vmem [shape: f32[32,1], index: 2, kind: input, shape index: {}]
  %s3 = inlined_call_operand.vmem [shape: bf16[2,32,16], index: 3, kind: output, shape index: {}]
  %s4 = sld [smem:[#allocation0]]
  $region45: #{input_embedding_forward.2} parent=0
    _
  %s6 = ssub.s32 1, %s4
  %s7 = scalar_select 0, %s6, %s4
  loop: start=0, step=1, limit=4
  $region2: #{input_embedding_forward.2} parent=0 // loop_pre_header
    _
  $region3: #{input_embedding_forward.2} parent=0 // loop_header
    %s9 = sphi 0, %s13
    %p10 = scmp.ge.s32.totalorder %s9, 4
    %s16 = sphi 0, %s28
    %s17 = sphi 0, %s24
    %s18 = sphi 0, %s16
    %s19 = sphi 0, %s17
    %s20 = sphi 0, %s18
    %s21 = sphi 0, %s19
    %s33 = sphi 0, %s35
    %s36 = sphi 0, %s33
    %s37 = sphi 0, %s36
    %s53 = sphi 0, %s37
    %s57 = sphi 0, %s57
    %s59 = sphi 0, %s57
    %s60 = sphi 0, %s59
    %s74 = sphi 0, %s60
    %s78 = sphi 0, %s78
    %s80 = sphi 0, %s78
    %s81 = sphi 0, %s80
    %s95 = sphi 0, %s81
    %s103 = sphi 0, %s105
    %s106 = sphi 0, %s103
    %s107 = sphi 0, %s106
    %s123 = sphi 0, %s107
  $region4: #{input_embedding_forward.2} parent=0 // loop_header_branch
    %12 = sbr.rel (%p10) target = $region8
  $region5: #{input_embedding_forward.2} parent=0 // loop_body
    %s14 = ssub.s32 %s9, 1
    %s15 = ssub.s32 %s9, 2
    %s22 = sadd.s32 1, %s17
    %p23 = scmp.ge.s32.totalorder %s22, 1
    %s24 = scalar_select %p23, 0, %s22
    %s25 = sadd.s32 1, %s16
    %s26 = scalar_select %p23, %s25, %s16
    %p27 = scmp.ge.s32.totalorder %s26, 2
    %s28 = scalar_select %p27, 0, %s26
    %s29 = ssub.s32 %s16, %s28
    %s30 = ssub.s32 %s17, %s24
    %s31 = sor.u32 %s29, %s30
    %p32 = scmp.eq.s32.totalorder %s31, 0
    %s34 = sadd.s32 %s33, 1
    %s35 = scalar_select %p32, %s33, %s34
    %p38 = pneg %p32
    %p39 = scmp.eq.s32.totalorder %s9, 1
    %p40 = por %p38, %p39
    %p41 = scmp.ne.s32.totalorder %s33, %s36
    %p42 = scmp.eq.s32.totalorder %s9, 0
    %p43 = por %p41, %p42
    %p44 = scmp.ne.s32.totalorder %s33, %s36
    %p45 = scmp.eq.s32.totalorder %s14, 1
    %p46 = por %p44, %p45
    %p47 = scmp.ne.s32.totalorder %s36, %s37
    %p48 = scmp.eq.s32.totalorder %s14, 0
    %p49 = por %p47, %p48
    %p50 = scmp.ne.s32.totalorder %s36, %s37
    %p51 = scmp.eq.s32.totalorder %s15, 1
    %p52 = por %p50, %p51
    %p54 = scmp.ne.s32.totalorder %s37, %s53
    %p55 = scmp.eq.s32.totalorder %s15, 0
    %p56 = por %p54, %p55
    %s58 = sadd.s32 %s57, 1
    %p61 = scmp.eq.s32.totalorder %s9, 1
    %p62 = scmp.ne.s32.totalorder %s57, %s59
    %p63 = scmp.eq.s32.totalorder %s9, 0
    %p64 = por %p62, %p63
    %p65 = scmp.ne.s32.totalorder %s57, %s59
    %p66 = scmp.eq.s32.totalorder %s14, 1
    %p67 = por %p65, %p66
    %p68 = scmp.ne.s32.totalorder %s59, %s60
    %p69 = scmp.eq.s32.totalorder %s14, 0
    %p70 = por %p68, %p69
    %p71 = scmp.ne.s32.totalorder %s59, %s60
    %p72 = scmp.eq.s32.totalorder %s15, 1
    %p73 = por %p71, %p72
    %p75 = scmp.ne.s32.totalorder %s60, %s74
    %p76 = scmp.eq.s32.totalorder %s15, 0
    %p77 = por %p75, %p76
    %s79 = sadd.s32 %s78, 1
    %p82 = scmp.eq.s32.totalorder %s9, 1
    %p83 = scmp.ne.s32.totalorder %s78, %s80
    %p84 = scmp.eq.s32.totalorder %s9, 0
    %p85 = por %p83, %p84
    %p86 = scmp.ne.s32.totalorder %s78, %s80
    %p87 = scmp.eq.s32.totalorder %s14, 1
    %p88 = por %p86, %p87
    %p89 = scmp.ne.s32.totalorder %s80, %s81
    %p90 = scmp.eq.s32.totalorder %s14, 0
    %p91 = por %p89, %p90
    %p92 = scmp.ne.s32.totalorder %s80, %s81
    %p93 = scmp.eq.s32.totalorder %s15, 1
    %p94 = por %p92, %p93
    %p96 = scmp.ne.s32.totalorder %s81, %s95
    %p97 = scmp.eq.s32.totalorder %s15, 0
    %p98 = por %p96, %p97
    %s99 = ssub.s32 %s16, %s28
    %s100 = ssub.s32 %s17, %s24
    %s101 = sor.u32 %s99, %s100
    %p102 = scmp.eq.s32.totalorder %s101, 0
    %s104 = sadd.s32 %s103, 1
    %s105 = scalar_select %p102, %s103, %s104
    %p108 = pneg %p102
    %p109 = scmp.eq.s32.totalorder %s9, 1
    %p110 = por %p108, %p109
    %p111 = scmp.ne.s32.totalorder %s103, %s106
    %p112 = scmp.eq.s32.totalorder %s9, 0
    %p113 = por %p111, %p112
    %p114 = scmp.ne.s32.totalorder %s103, %s106
    %p115 = scmp.eq.s32.totalorder %s14, 1
    %p116 = por %p114, %p115
    %p117 = scmp.ne.s32.totalorder %s106, %s107
    %p118 = scmp.eq.s32.totalorder %s14, 0
    %p119 = por %p117, %p118
    %p120 = scmp.ne.s32.totalorder %s106, %s107
    %p121 = scmp.eq.s32.totalorder %s15, 1
    %p122 = por %p120, %p121
    %p124 = scmp.ne.s32.totalorder %s107, %s123
    %p125 = scmp.eq.s32.totalorder %s15, 0
    %p126 = por %p124, %p125
    %p127 = scmp.le.s32.totalorder 1, %s9
    %p128 = scmp.lt.s32.totalorder %s9, 3
    %p129 = pnand %p127, %p128
    %p130 = pneg %p129
    // Predicated region
    $region9: #{input_embedding_forward.2} parent=5 // pred_check
      _
    $region10: #{input_embedding_forward.2} parent=5 // pred_check_branch
      %132 = sbr.rel (%p129) target = $region12
    $region11: #{input_embedding_forward.2} parent=5 // pred_region
      %s133 = ssub.s32 %s9, 1
      // Predicated region
      $region13: #{input_embedding_forward.2} parent=11 // pred_check
        %p134 = pneg %p70
      $region14: #{input_embedding_forward.2} parent=11 // pred_check_branch
        %136 = sbr.rel (%p134) target = $region16
      $region15: #{input_embedding_forward.2} parent=11 // pred_region
        _
      $region16: #{input_embedding_forward.2} parent=11 // pred_fallthru
        _
      // Predicated region
      $region17: #{input_embedding_forward.2} parent=11 // pred_check
        %p137 = pneg %p91
      $region18: #{input_embedding_forward.2} parent=11 // pred_check_branch
        %139 = sbr.rel (%p137) target = $region20
      $region19: #{input_embedding_forward.2} parent=11 // pred_region
        _
      $region20: #{input_embedding_forward.2} parent=11 // pred_fallthru
        _
    $region12: #{input_embedding_forward.2} parent=5 // pred_fallthru
      _
    %p140 = scmp.lt.s32.totalorder %s9, 2
    // Predicated region
    $region21: #{input_embedding_forward.2} parent=5 // pred_check
      %p141 = pneg %p140
    $region22: #{input_embedding_forward.2} parent=5 // pred_check_branch
      %143 = sbr.rel (%p141) target = $region24
    $region23: #{input_embedding_forward.2} parent=5 // pred_region
      // Predicated region
      $region25: #{input_embedding_forward.2} parent=23 // pred_check
        %p144 = pneg %p43
      $region26: #{input_embedding_forward.2} parent=23 // pred_check_branch
        %146 = sbr.rel (%p144) target = $region28
      $region27: #{input_embedding_forward.2} parent=23 // pred_region
        %p147 = scmp.lt.s32.totalorder %s16, 1
        %s148 = scalar_select %p147, %s16, 1
        %p149 = scmp.lt.s32.totalorder %s17, 0
        %s150 = scalar_select %p149, %s17, 0
        %s151 = smul.addr %s148, 16
        %s152 = sadd.s32 %s150, %s151
        %s153 = smul.addr %s152, 4
        %s154 = scalar_lea.vmem %s0, %s153
      $region28: #{input_embedding_forward.2} parent=23 // pred_fallthru
        _
    $region24: #{input_embedding_forward.2} parent=5 // pred_fallthru
      _
    %p155 = scmp.le.s32.totalorder 1, %s9
    %p156 = scmp.lt.s32.totalorder %s9, 3
    %p157 = pnand %p155, %p156
    %p158 = pneg %p157
    // Predicated region
    $region29: #{input_embedding_forward.2} parent=5 // pred_check
      _
    $region30: #{input_embedding_forward.2} parent=5 // pred_check_branch
      %160 = sbr.rel (%p157) target = $region32
    $region31: #{input_embedding_forward.2} parent=5 // pred_region
      %s161 = ssub.s32 %s9, 1
      %p162 = scmp.lt.s32.totalorder %s18, 1
      %s163 = scalar_select %p162, %s18, 1
      %p164 = scmp.lt.s32.totalorder %s19, 0
      %s165 = scalar_select %p164, %s19, 0
      %s166 = smul.addr %s163, 16
      %s167 = sadd.s32 %s165, %s166
      %s168 = smul.addr %s167, 4
      %s169 = scalar_lea.vmem %s0, %s168
      %p170 = pneg %p49
      %p171 = pneg %p46
      %p172 = pneg %p70
      %p173 = pneg %p67
      %p174 = pneg %p91
      %p175 = pneg %p88
      %p176 = pneg %p119
      %p177 = pneg %p116
      %p178 = scmp.lt.s32.totalorder %s18, 1
      %s179 = scalar_select %p178, %s18, 1
      %p180 = scmp.lt.s32.totalorder %s19, 0
      %s181 = scalar_select %p180, %s19, 0
      %s182 = smul.addr %s179, 4
      %s183 = sadd.s32 %s181, %s182
      %s184 = smul.addr %s183, 4
      %s185 = scalar_lea.vmem %s3, %s184
      %p186 = scmp.lt.s32.totalorder %s18, 1
      %s187 = scalar_select %p186, %s18, 1
      %p188 = scmp.lt.s32.totalorder %s19, 0
      %s189 = scalar_select %p188, %s19, 0
      %s190 = smul.addr %s187, 16
      %s191 = sadd.s32 %s189, %s190
      %s192 = smul.addr %s191, 4
      %s193 = scalar_lea.vmem %s0, %s192
      %p194 = scmp.lt.s32.totalorder %s18, 1
      %s195 = scalar_select %p194, %s18, 1
      %p196 = scmp.lt.s32.totalorder %s19, 0
      %s197 = scalar_select %p196, %s19, 0
      %s198 = smul.addr %s195, 4
      %s199 = sadd.s32 %s197, %s198
      %s200 = smul.addr %s199, 4
      %s201 = scalar_lea.vmem %s3, %s200
      %v203 = vld [vmem:[%s1] sm:$0xf]
      %v204 = vld [vmem:[%s1 + $0x4] sm:$0xf]
      %v205 = vld [vmem:[%s1 + $0x8] sm:$0xf]
      %v206 = vld [vmem:[%s1 + $0xc] sm:$0xf]
      %v207 = vld [vmem:[%s193] sm:$0xf]
      %v208 = vld [vmem:[%s193 + $0x4] sm:$0xf]
      %v209 = vld [vmem:[%s193 + $0x8] sm:$0xf]
      %v210 = vld [vmem:[%s193 + $0xc] sm:$0xf]
      %v211 = vld [vmem:[%s193 + $0x10] sm:$0xf]
      %v212 = vld [vmem:[%s193 + $0x14] sm:$0xf]
      %v213 = vld [vmem:[%s193 + $0x18] sm:$0xf]
      %v214 = vld [vmem:[%s193 + $0x1c] sm:$0xf]
      %v215 = vld [vmem:[%s193 + $0x20] sm:$0xf]
      %v216 = vld [vmem:[%s193 + $0x24] sm:$0xf]
      %v217 = vld [vmem:[%s193 + $0x28] sm:$0xf]
      %v218 = vld [vmem:[%s193 + $0x2c] sm:$0xf]
      %v219 = vld [vmem:[%s193 + $0x30] sm:$0xf]
      %v220 = vld [vmem:[%s193 + $0x34] sm:$0xf]
      %v221 = vld [vmem:[%s193 + $0x38] sm:$0xf]
      %v222 = vld [vmem:[%s193 + $0x3c] sm:$0xf]
      %v223 = vld [vmem:[%s2] sm:$0xff]
      %v224 = vld [vmem:[%s2 + $0x8] sm:$0xff]
      %v225 = vld [vmem:[%s2 + $0x10] sm:$0xff]
      %v226 = vld [vmem:[%s2 + $0x18] sm:$0xff]
      %228 = vset.pattern.permute.xlu0 0
      %229 = vperm.xlu0 %228, %v223
      %v230 = vpop.permute.xlu0 %229
      %233 = vset.pattern.permute.xlu0 0
      %234 = vperm.xlu0 %233, %v224
      %v235 = vpop.permute.xlu0 %234
      %238 = vset.pattern.permute.xlu0 0
      %239 = vperm.xlu0 %238, %v225
      %v240 = vpop.permute.xlu0 %239
      %243 = vset.pattern.permute.xlu0 0
      %244 = vperm.xlu0 %243, %v226
      %v245 = vpop.permute.xlu0 %244
      %v251 = vunpack.c.l.b16 %v203
      %v252 = vunpack.c.l.b16 %v204
      %v253 = vunpack.c.l.b16 %v205
      %v254 = vunpack.c.l.b16 %v206
      %v255 = vpack.c.b16 %v252, %v251
      %v256 = vpack.c.b16 %v254, %v253
      %v275 = vunpack.c.l.b16 %v207
      %v276 = vunpack.c.l.b16 %v208
      %v277 = vunpack.c.l.b16 %v209
      %v278 = vunpack.c.l.b16 %v210
      %v279 = vunpack.c.l.b16 %v211
      %v280 = vunpack.c.l.b16 %v212
      %v281 = vunpack.c.l.b16 %v213
      %v282 = vunpack.c.l.b16 %v214
      %v283 = vunpack.c.l.b16 %v215
      %v284 = vunpack.c.l.b16 %v216
      %v285 = vunpack.c.l.b16 %v217
      %v286 = vunpack.c.l.b16 %v218
      %v287 = vunpack.c.l.b16 %v219
      %v288 = vunpack.c.l.b16 %v220
      %v289 = vunpack.c.l.b16 %v221
      %v290 = vunpack.c.l.b16 %v222
      %v291 = vpack.c.b16 %v276, %v275
      %v292 = vpack.c.b16 %v278, %v277
      %v293 = vpack.c.b16 %v280, %v279
      %v294 = vpack.c.b16 %v282, %v281
      %v295 = vpack.c.b16 %v284, %v283
      %v296 = vpack.c.b16 %v286, %v285
      %v297 = vpack.c.b16 %v288, %v287
      %v298 = vpack.c.b16 %v290, %v289
      %307 = vmatprep.subr.bf16.mxu0 0
      %308 = vmatpush1.bf16.msra.mxu0 %v298
      %309 = vmatprep.subr.bf16.mxu0 0
      %310 = vmatpush1.bf16.msra.mxu0 %v297
      %311 = vmatprep.subr.bf16.mxu0 0
      %312 = vmatpush1.bf16.msra.mxu0 %v296
      %313 = vmatprep.subr.bf16.mxu0 0
      %314 = vmatpush1.bf16.msra.mxu0 %v295
      %315 = vmatprep.subr.bf16.mxu0 0
      %316 = vmatpush1.bf16.msra.mxu0 %v294
      %317 = vmatprep.subr.bf16.mxu0 0
      %318 = vmatpush1.bf16.msra.mxu0 %v293
      %319 = vmatprep.subr.bf16.mxu0 0
      %320 = vmatpush1.bf16.msra.mxu0 %v292
      %321 = vmatprep.subr.bf16.mxu0 0
      %322 = vmatpush1.bf16.msra.mxu0 %v291
      %323 = vmatprep.subr.bf16.mxu0 0
      %324 = vmatpush2.bf16.msra.mxu0 0
      %325 = vmatprep.subr.bf16.mxu0 0
      %326 = vmatpush2.bf16.msra.mxu0 0
      %327 = vmatprep.subr.bf16.mxu0 0
      %328 = vmatpush2.bf16.msra.mxu0 0
      %329 = vmatprep.subr.bf16.mxu0 0
      %330 = vmatpush2.bf16.msra.mxu0 0
      %331 = vmatprep.subr.bf16.mxu0 0
      %332 = vmatpush2.bf16.msra.mxu0 0
      %333 = vmatprep.subr.bf16.mxu0 0
      %334 = vmatpush2.bf16.msra.mxu0 0
      %335 = vmatprep.subr.bf16.mxu0 0
      %336 = vmatpush2.bf16.msra.mxu0 0
      %337 = vmatprep.subr.bf16.mxu0 0
      %338 = vmatpush2.bf16.msra.mxu0 0
      %339 = vmatprep.mubr.bf16.mxu0 0
      %340 = vmatmul.mubr.bf16.gmra.mxu0 %v255
      %v341 = vpop.f32.mrf.mxu0
      %v342 = vadd.f32 %v230, %v341
      %v343 = vpop.f32.mrf.mxu0
      %v344 = vpop.f32.mrf.mxu0
      %v345 = vadd.f32 %v235, %v344
      %v346 = vpop.f32.mrf.mxu0
      %347 = vmatprep.mubr.bf16.mxu0 0
      %348 = vmatmul.mubr.bf16.gmra.mxu0 %v256
      %v349 = vpop.f32.mrf.mxu0
      %v350 = vadd.f32 %v240, %v349
      %v351 = vpop.f32.mrf.mxu0
      %v352 = vpop.f32.mrf.mxu0
      %v353 = vadd.f32 %v245, %v352
      %v354 = vpop.f32.mrf.mxu0
      %355 = vdwg.mxu0
      %v356 = vpack.c.bf16 %v345, %v342
      %v357 = vpack.c.bf16 %v353, %v350
      %v360 = vunpack.c.l.b16 %v356
      %v361 = vunpack.c.h.b16 %v356
      %v362 = vunpack.c.l.b16 %v357
      %v363 = vunpack.c.h.b16 %v357
      %v364 = vpack.c.b16 %v360, %v360
      %v365 = vpack.c.b16 %v361, %v361
      %v366 = vpack.c.b16 %v362, %v362
      %v367 = vpack.c.b16 %v363, %v363
      %vm372 = vcmask 125952
      %373 = vst.msk [vmem:[%s201] sm:$0xf] %vm372, %v364
      %374 = vst.msk [vmem:[%s201 + $0x4] sm:$0xf] %vm372, %v365
      %375 = vst.msk [vmem:[%s201 + $0x8] sm:$0xf] %vm372, %v366
      %376 = vst.msk [vmem:[%s201 + $0xc] sm:$0xf] %vm372, %v367
      %p377 = scmp.lt.s32.totalorder %s18, 1
      %s378 = scalar_select %p377, %s18, 1
      %p379 = scmp.lt.s32.totalorder %s19, 0
      %s380 = scalar_select %p379, %s19, 0
      %s381 = smul.addr %s378, 4
      %s382 = sadd.s32 %s380, %s381
      %s383 = smul.addr %s382, 4
      %s384 = scalar_lea.vmem %s3, %s383
      // Predicated region
      $region33: #{input_embedding_forward.2} parent=31 // pred_check
        %p385 = pneg %p116
      $region34: #{input_embedding_forward.2} parent=31 // pred_check_branch
        %387 = sbr.rel (%p385) target = $region36
      $region35: #{input_embedding_forward.2} parent=31 // pred_region
        _
      $region36: #{input_embedding_forward.2} parent=31 // pred_fallthru
        _
    $region32: #{input_embedding_forward.2} parent=5 // pred_fallthru
      _
    %p388 = scmp.le.s32.totalorder 2, %s9
    // Predicated region
    $region37: #{input_embedding_forward.2} parent=5 // pred_check
      %p389 = pneg %p388
    $region38: #{input_embedding_forward.2} parent=5 // pred_check_branch
      %391 = sbr.rel (%p389) target = $region40
    $region39: #{input_embedding_forward.2} parent=5 // pred_region
      %s392 = ssub.s32 %s9, 2
      // Predicated region
      $region41: #{input_embedding_forward.2} parent=39 // pred_check
        %p393 = pneg %p122
      $region42: #{input_embedding_forward.2} parent=39 // pred_check_branch
        %395 = sbr.rel (%p393) target = $region44
      $region43: #{input_embedding_forward.2} parent=39 // pred_region
        %p396 = scmp.lt.s32.totalorder %s20, 1
        %s397 = scalar_select %p396, %s20, 1
        %p398 = scmp.lt.s32.totalorder %s21, 0
        %s399 = scalar_select %p398, %s21, 0
        %s400 = smul.addr %s397, 4
        %s401 = sadd.s32 %s399, %s400
        %s402 = smul.addr %s401, 4
        %s403 = scalar_lea.vmem %s3, %s402
      $region44: #{input_embedding_forward.2} parent=39 // pred_fallthru
        _
    $region40: #{input_embedding_forward.2} parent=5 // pred_fallthru
      _
  $region6: #{input_embedding_forward.2} parent=0 // loop_footer
    %s13 = sadd.s32 1, %s9
  $region7: #{input_embedding_forward.2} parent=0 // loop_footer_branch
    %8 = sbr.rel target = $region3
  $region8: #{input_embedding_forward.2} parent=0 // loop_exit
    _

</llo_original>
